<compile_context>
chip_gen: v7x
topology: tpu7x:2x2x1
jax: 0.10.0
libtpu: 0.0.40
codegen_flags: <defaults>
</compile_context>

<pallas_src>
import math

import jax
import jax.numpy as jnp
from jax.experimental import pallas as pl
from jax.experimental.pallas import tpu as pltpu


def _droppath_scale_kernel(scale_ref, x_ref, o_ref):
    # scale_ref: (Bblk, 1) per-sample scale (0 or 1/keep_prob), broadcast over lanes.
    # x_ref / o_ref: (Bblk, Tile) lane-dense tiles of the flattened input.
    o_ref[...] = x_ref[...] * scale_ref[...]


def _choose_blocks(B, F, itemsize, max_bytes=4 << 20):
    """Pick (row_block, feature_tile) honoring the (8,128) constraint and a VMEM cap."""
    # Lane-dense tile along the flattened feature axis.
    if F % 128 == 0:
        tile = F
        # Halve while too big, keeping a multiple of 128 that still divides F.
        while tile * itemsize > max_bytes and tile % 256 == 0:
            tile //= 2
    else:
        tile = F  # full-dim block is allowed even when not a multiple of 128
    # Rows per block: start at 8 (sublane multiple) and grow while it fits.
    if B % 8 == 0:
        bblk = 8
        while (B % (bblk * 2) == 0) and (bblk * 2 * tile * itemsize <= max_bytes):
            bblk *= 2
    else:
        bblk = B  # full-dim block
    return bblk, tile


def drop_path(x, drop_prob: float = 0.0, *, training: bool = True, key=None):
    """Pallas DropPath. Identity in eval mode or when drop_prob == 0."""
    if drop_prob == 0.0 or not training:
        return x
    keep_prob = 1.0 - drop_prob

    B = x.shape[0]
    F = int(math.prod(x.shape[1:])) if x.ndim > 1 else 1

    if key is None:
        key = jax.random.PRNGKey(0)

    # Per-sample Bernoulli(keep_prob), hoisted out of the hot loop:
    #   mask = floor(keep_prob + U[0,1))   (same construction as torch)
    u = jax.random.uniform(key, (B, 1), dtype=jnp.float32)
    scale = (jnp.floor(jnp.float32(keep_prob) + u) * (1.0 / keep_prob)).astype(x.dtype)  # (B, 1)

    x2 = x.reshape(B, F)
    itemsize = jnp.dtype(x.dtype).itemsize
    bblk, tile = _choose_blocks(B, F, itemsize)
    grid = (B // bblk, F // tile)

    cost = pl.CostEstimate(
        flops=B * F,
        transcendentals=0,
        bytes_accessed=2 * B * F * itemsize + B * itemsize,
    )

    y2 = pl.pallas_call(
        _droppath_scale_kernel,
        out_shape=jax.ShapeDtypeStruct((B, F), x.dtype),
        grid=grid,
        in_specs=[
            pl.BlockSpec((bblk, 1), lambda i, j: (i, 0)),      # per-sample scale
            pl.BlockSpec((bblk, tile), lambda i, j: (i, j)),   # data tile
        ],
        out_specs=pl.BlockSpec((bblk, tile), lambda i, j: (i, j)),
        compiler_params=pltpu.CompilerParams(
            dimension_semantics=("parallel", "parallel"),
        ),
        cost_estimate=cost,
    )(scale, x2)
    return y2.reshape(x.shape)


if __name__ == "__main__":
    key = jax.random.PRNGKey(0)
    kx, kmask = jax.random.split(key)

    # ViT token layout: (batch, seq, hidden)
    B, N, D = 2, 8, 32
    x = jax.random.normal(kx, (B, N, D), dtype=jnp.float32)

    drop_prob = 0.25
    keep_prob = 1.0 - drop_prob

    # Training path (kernel runs).
    y = drop_path(x, drop_prob=drop_prob, training=True, key=kmask)
    y = jax.block_until_ready(y)

    # Sanity: each sample is either fully zeroed or scaled by exactly 1/keep_prob.
    ok = True
    for b in range(B):
        yb = y[b]
        zeroed = bool(jnp.allclose(yb, 0.0))
        scaled = bool(jnp.allclose(yb, x[b] / keep_prob, rtol=1e-5, atol=1e-5))
        ok = ok and (zeroed or scaled)

    # Eval path (identity).
    y_eval = jax.block_until_ready(drop_path(x, drop_prob=drop_prob, training=False))
    ok = ok and bool(jnp.array_equal(y_eval, x))

    # drop_prob == 0 path (identity).
    y_p0 = jax.block_until_ready(drop_path(x, drop_prob=0.0, training=True))
    ok = ok and bool(jnp.array_equal(y_p0, x))

    if ok:
        print("KERNEL_OK")
    else:
        raise SystemExit("DropPath kernel produced unexpected output")
</pallas_src>

<mosaic_0001>
module attributes {stable_mosaic.version = 11 : i64} {
  func.func @_droppath_scale_kernel(%arg0: i32, %arg1: i32, %arg2: memref<2x1xf32, #tpu.memory_space<vmem>>, %arg3: memref<2x256xf32, #tpu.memory_space<vmem>>, %arg4: memref<2x256xf32, #tpu.memory_space<vmem>>) attributes {dimension_semantics = [#tpu.dimension_semantics<parallel>, #tpu.dimension_semantics<parallel>], iteration_bounds = array<i64: 1, 1>, scalar_prefetch = 0 : i64, scratch_operands = 0 : i64, tpu.core_type = #tpu.core_type<tc>, window_params = [{transform_indices = @transform_0, window_bounds = array<i64: 2, 1>}, {transform_indices = @transform_1, window_bounds = array<i64: 2, 256>}, {transform_indices = @transform_2, window_bounds = array<i64: 2, 256>}]} {
    %c0 = arith.constant 0 : index
    %c0_0 = arith.constant 0 : index
    %0 = vector.load %arg3[%c0, %c0_0] : memref<2x256xf32, #tpu.memory_space<vmem>>, vector<2x256xf32>
    %c0_1 = arith.constant 0 : index
    %c0_2 = arith.constant 0 : index
    %1 = vector.load %arg2[%c0_1, %c0_2] : memref<2x1xf32, #tpu.memory_space<vmem>>, vector<2x1xf32>
    %2 = vector.broadcast %1 : vector<2x1xf32> to vector<2x256xf32>
    %3 = arith.mulf %0, %2 : vector<2x256xf32>
    %c0_3 = arith.constant 0 : index
    %c0_4 = arith.constant 0 : index
    %4 = vector.load %arg4[%c0_3, %c0_4] : memref<2x256xf32, #tpu.memory_space<vmem>>, vector<2x256xf32>
    tpu.vector_store %arg4[%c0_3, %c0_4], %3 {strides = array<i32>} : memref<2x256xf32, #tpu.memory_space<vmem>>, vector<2x256xf32>,
    return
  }
  func.func @transform_0(%arg0: i32, %arg1: i32) -> (i32, i32) {
    %c0_i32 = arith.constant 0 : i32
    %c0_i32_0 = arith.constant 0 : i32
    return %arg0, %c0_i32 : i32, i32
  }
  func.func @transform_1(%arg0: i32, %arg1: i32) -> (i32, i32) {
    %c0_i32 = arith.constant 0 : i32
    return %arg0, %arg1 : i32, i32
  }
  func.func @transform_2(%arg0: i32, %arg1: i32) -> (i32, i32) {
    %c0_i32 = arith.constant 0 : i32
    return %arg0, %arg1 : i32, i32
  }
}

</mosaic_0001>

<llo_original>
// kernel: tpu_custom_call.1
$region0: #{tpu_custom_call.1}
  #allocation0 [shape = 'u32[]', space=smem, size = 0x4, offset = 0x4, fixed_abs, tag = 'smem constant byte address 0x4 - core index']
  #allocation1 [shape = 'u32[144,128]{1,0:T(1,128)}', space=vmem, size = 0x12000, scoped, tag = 'internal scratch']
  %s0 = inlined_call_operand.vmem [shape: f32[2,1], index: 0, kind: input, shape index: {}]
  %s1 = inlined_call_operand.vmem [shape: f32[2,256], index: 1, kind: input, shape index: {}]
  %s2 = inlined_call_operand.hbm [shape: f32[2,256], index: 2, kind: output, shape index: {}]
  %s3 = sld [smem:[#allocation0]]
  $region18: #{tpu_custom_call.1} parent=0
    _
  %s5 = ssub.s32 1, %s3
  %s6 = scalar_select 0, %s5, %s3
  $region1: #{tpu_custom_call.1} parent=0
    #allocation2 [shape = 'u8[2048]{0}', space=vmem, size = 0x800, scoped, tag = 'output window, operand 0, single buffered']
    #allocation3 [shape = 's32[1]{0}', space=sflag, size = 0x4, scoped, tag = 'scoped memory for tpu_custom_call.1']
    %7 = vsyncpa [#allocation3], 0
    // Predicated region
    $region2: #{tpu_custom_call.1} parent=1 // pred_check
      _
    $region3: #{tpu_custom_call.1} parent=1 // pred_check_branch
      %9 = sbr.rel (0) target = $region5
    $region4: #{tpu_custom_call.1} parent=1 // pred_region
      _
    $region5: #{tpu_custom_call.1} parent=1 // pred_fallthru
      _
    // Predicated region
    $region6: #{tpu_custom_call.1} parent=1 // pred_check
      _
    $region7: #{tpu_custom_call.1} parent=1 // pred_check_branch
      %11 = sbr.rel (0) target = $region9
    $region8: #{tpu_custom_call.1} parent=1 // pred_region
      _
    $region9: #{tpu_custom_call.1} parent=1 // pred_fallthru
      _
    %v12 = vld [vmem:[%s1] sm:$0xf]
    %v13 = vld [vmem:[%s0] sm:$0x3]
    %15 = vset.pattern.permute.xlu0 0
    %16 = vperm.xlu0 %15, %v13
    %v17 = vpop.permute.xlu0 %16
    %v19 = vunpack.c.l.s4 269488144
    %v20 = vunpack.c.0.s8 %v19
    %v21 = vlaneseq
    %v22 = vshrl.u32 %v21, 7
    %v23 = vsub.s32 %v20, %v22
    %v24 = vrot.slane %v17, %v23
    %v26 = vmul.f32 %v12, %v24
    %27 = vst [vmem:[#allocation2] sm:$0xf] %v26
    // Predicated region
    $region10: #{tpu_custom_call.1} parent=1 // pred_check
      _
    $region11: #{tpu_custom_call.1} parent=1 // pred_check_branch
      %29 = sbr.rel (0) target = $region13
    $region12: #{tpu_custom_call.1} parent=1 // pred_region
      %s31 = ssub.s32 64, 64
      %32 = vsyncadd [#allocation3], %s31
      %s34 = sshll.u32 [#allocation2], 4
      %s35 = int_to_ptr.vmem [resolvable:$true] %s34
      %37 = dma.vmem_to_hbm [thread:$0]  %s35, 64, %s2, [#allocation3]
    $region13: #{tpu_custom_call.1} parent=1 // pred_fallthru
      _
    // Predicated region
    $region14: #{tpu_custom_call.1} parent=1 // pred_check
      _
    $region15: #{tpu_custom_call.1} parent=1 // pred_check_branch
      %39 = sbr.rel (0) target = $region17
    $region16: #{tpu_custom_call.1} parent=1 // pred_region
      %40 = dma.done [#allocation3], 64
    $region17: #{tpu_custom_call.1} parent=1 // pred_fallthru
      _
    %41 = vsyncpa [#allocation3], 1

</llo_original>
